<compile_context>
chip_gen: v5e
topology: v5e:2x2
jax: 0.10.0
libtpu: 0.0.40
codegen_flags: <defaults>
</compile_context>

<pallas_src>
import jax
import jax.numpy as jnp
from jax.experimental import pallas as pl
from jax.experimental.pallas import tpu as pltpu


def _add_prompt_kernel(x_ref, prompt_ref, o_ref):
    # Lane-dense, full-block broadcast add: (bt, CHW) + (1, CHW) -> (bt, CHW).
    o_ref[...] = x_ref[...] + prompt_ref[...]


def _num_tensorcores_per_chip():
    """Best-effort detection of TensorCores per chip (v7x has 2)."""
    try:
        kind = jax.devices()[0].device_kind.lower()
        if "v7" in kind:
            return 2
    except Exception:
        pass
    return 1


def _pick_batch_block(batch, per_elem_bytes, prompt_bytes, vmem_limit_bytes,
                      num_tensorcores):
    """Largest batch block bt such that:
         - 2x input + 2x output blocks + prompt fit under ~78% of the VMEM
           limit (real, unpadded footprint thanks to the 2-D flatten),
         - bt is a multiple of 8 or bt == batch (trailing-dims rule),
         - on multi-TC chips (v7x) there are >=2 (preferably an even number
           of) grid steps so the 'parallel' batch axis balances across cores;
           on single-TC chips we never force extra steps."""
    budget = int(vmem_limit_bytes * 0.78) - 2 * prompt_bytes
    cap = max(1, budget // (4 * per_elem_bytes))
    min_grid = 2 if (num_tensorcores >= 2 and batch > 1) else 1
    target = min(batch, cap, pl.cdiv(batch, min_grid))
    if target >= batch:
        return batch
    bt = (target // 8) * 8
    if bt == 0:
        # Huge-image fallback: keep the sublane rule; caller raises the limit.
        bt = min(batch, 8)
    if bt >= batch:
        return batch
    if num_tensorcores >= 2:
        steps = pl.cdiv(batch, bt)
        if steps > 1 and steps % 2 == 1:
            cand = bt - 8
            while cand >= 8:
                if pl.cdiv(batch, cand) % 2 == 0:
                    bt = cand
                    break
                cand -= 8
    return bt


def pad_prompter_forward(x, pad_up, pad_down, pad_left, pad_right):
    """x: (B, 3, H, W). Returns x + assembled prompt (broadcast over batch)."""
    B, C, H, W = x.shape
    ps = pad_up.shape[2]
    bs = pad_left.shape[2]
    assert C == 3 and H == W and bs == H - 2 * ps

    dt = x.dtype
    # Assemble the tiny (1, C, H, W) prompt frame once, in x's dtype.
    base = jnp.zeros((1, C, bs, bs), dtype=dt)
    mid = jnp.concatenate([pad_left.astype(dt), base, pad_right.astype(dt)],
                          axis=3)
    prompt = jnp.concatenate([pad_up.astype(dt), mid, pad_down.astype(dt)],
                             axis=2)

    # Flattened, lane-dense 2-D views (last axis = full C*H*W extent).
    chw = C * H * W
    x2 = x.reshape(B, chw)
    p2 = prompt.reshape(1, chw)

    num_tc = _num_tensorcores_per_chip()
    vmem_limit = (48 if num_tc >= 2 else 64) * 1024 * 1024
    per_elem = chw * dt.itemsize
    prompt_bytes = chw * dt.itemsize
    bt = _pick_batch_block(B, per_elem, prompt_bytes, vmem_limit, num_tc)
    # If the huge-image fallback block overflows the default limit, raise it.
    required = int((4 * bt * per_elem + 2 * prompt_bytes) * 1.25)
    vmem_limit = max(vmem_limit, required)

    grid = (pl.cdiv(B, bt),)

    def build(single_buffer_prompt):
        if single_buffer_prompt:
            prompt_spec = pl.BlockSpec((1, chw), lambda b: (0, 0),
                                       pipeline_mode=pl.Buffered(1))
        else:
            prompt_spec = pl.BlockSpec((1, chw), lambda b: (0, 0))
        return pl.pallas_call(
            _add_prompt_kernel,
            out_shape=jax.ShapeDtypeStruct((B, chw), dt),
            grid_spec=pltpu.PrefetchScalarGridSpec(
                num_scalar_prefetch=0,
                grid=grid,
                in_specs=[pl.BlockSpec((bt, chw), lambda b: (b, 0)),
                          prompt_spec],
                out_specs=pl.BlockSpec((bt, chw), lambda b: (b, 0)),
            ),
            input_output_aliases={0: 0},  # result written in place of x2
            compiler_params=pltpu.CompilerParams(
                dimension_semantics=("parallel",),
                vmem_limit_bytes=vmem_limit,
            ),
        )

    try:
        out2 = build(True)(x2, p2)
    except Exception:
        # Single-buffering the resident prompt is only a minor VMEM saving;
        # fall back to the default double-buffered spec if this JAX/Mosaic
        # version rejects pl.Buffered(1).
        out2 = build(False)(x2, p2)

    return out2.reshape(B, C, H, W)


def pad_prompter_reference(x, pad_up, pad_down, pad_left, pad_right):
    """Pure-JAX reference mirroring the PyTorch forward."""
    B = x.shape[0]
    bs = pad_left.shape[2]
    dt = x.dtype
    base = jnp.zeros((1, 3, bs, bs), dtype=dt)
    prompt = jnp.concatenate([pad_left.astype(dt), base, pad_right.astype(dt)],
                             axis=3)
    prompt = jnp.concatenate([pad_up.astype(dt), prompt, pad_down.astype(dt)],
                             axis=2)
    prompt = jnp.concatenate(B * [prompt], axis=0)
    return x + prompt


if __name__ == "__main__":
    # Small shapes consistent with the module (channels fixed at 3).
    batch = 2
    image_size = 32
    prompt_size = 4
    base_size = image_size - 2 * prompt_size

    key = jax.random.PRNGKey(0)
    kx, ku, kd, kl, kr = jax.random.split(key, 5)

    x = jax.random.normal(kx, (batch, 3, image_size, image_size), jnp.float32)
    # Deterministic "randn" parameter init (synthetic weights).
    pad_up = jax.random.normal(ku, (1, 3, prompt_size, image_size), jnp.float32)
    pad_down = jax.random.normal(kd, (1, 3, prompt_size, image_size), jnp.float32)
    pad_left = jax.random.normal(kl, (1, 3, base_size, prompt_size), jnp.float32)
    pad_right = jax.random.normal(kr, (1, 3, base_size, prompt_size), jnp.float32)

    out = pad_prompter_forward(x, pad_up, pad_down, pad_left, pad_right)
    out = jax.block_until_ready(out)

    ref = pad_prompter_reference(x, pad_up, pad_down, pad_left, pad_right)
    assert out.shape == ref.shape and out.dtype == ref.dtype
    assert jnp.allclose(out, ref, atol=1e-6, rtol=1e-6)

    print("KERNEL_OK")
</pallas_src>

<mosaic_0001>
module attributes {stable_mosaic.version = 11 : i64} {
  func.func @_add_prompt_kernel(%arg0: i32, %arg1: memref<2x3072xf32, #tpu.memory_space<vmem>>, %arg2: memref<1x3072xf32, #tpu.memory_space<vmem>>, %arg3: memref<2x3072xf32, #tpu.memory_space<vmem>>) attributes {dimension_semantics = [#tpu.dimension_semantics<parallel>], iteration_bounds = array<i64: 1>, scalar_prefetch = 0 : i64, scratch_operands = 0 : i64, tpu.core_type = #tpu.core_type<tc>, window_params = [{transform_indices = @transform_0, window_bounds = array<i64: 2, 3072>}, {pipeline_mode = #tpu.pipeline_mode<synchronous>, transform_indices = @transform_1, window_bounds = array<i64: 1, 3072>}, {transform_indices = @transform_2, window_bounds = array<i64: 2, 3072>}]} {
    %c0 = arith.constant 0 : index
    %c0_0 = arith.constant 0 : index
    %0 = vector.load %arg1[%c0, %c0_0] : memref<2x3072xf32, #tpu.memory_space<vmem>>, vector<2x3072xf32>
    %c0_1 = arith.constant 0 : index
    %c0_2 = arith.constant 0 : index
    %1 = vector.load %arg2[%c0_1, %c0_2] : memref<1x3072xf32, #tpu.memory_space<vmem>>, vector<1x3072xf32>
    %2 = vector.broadcast %1 : vector<1x3072xf32> to vector<2x3072xf32>
    %3 = arith.addf %0, %2 : vector<2x3072xf32>
    %c0_3 = arith.constant 0 : index
    %c0_4 = arith.constant 0 : index
    %4 = vector.load %arg3[%c0_3, %c0_4] : memref<2x3072xf32, #tpu.memory_space<vmem>>, vector<2x3072xf32>
    tpu.vector_store %arg3[%c0_3, %c0_4], %3 {strides = array<i32>} : memref<2x3072xf32, #tpu.memory_space<vmem>>, vector<2x3072xf32>,
    return
  }
  func.func @transform_0(%arg0: i32) -> (i32, i32) {
    %c0_i32 = arith.constant 0 : i32
    %c0_i32_0 = arith.constant 0 : i32
    return %arg0, %c0_i32 : i32, i32
  }
  func.func @transform_1(%arg0: i32) -> (i32, i32) {
    %c0_i32 = arith.constant 0 : i32
    %c0_i32_0 = arith.constant 0 : i32
    %c0_i32_1 = arith.constant 0 : i32
    return %c0_i32, %c0_i32_0 : i32, i32
  }
  func.func @transform_2(%arg0: i32) -> (i32, i32) {
    %c0_i32 = arith.constant 0 : i32
    %c0_i32_0 = arith.constant 0 : i32
    return %arg0, %c0_i32 : i32, i32
  }
}

module attributes {stable_mosaic.version = 11 : i64} {
  func.func @_add_prompt_kernel(%arg0: i32, %arg1: memref<2x3072xf32, #tpu.memory_space<vmem>>, %arg2: memref<1x3072xf32, #tpu.memory_space<vmem>>, %arg3: memref<2x3072xf32, #tpu.memory_space<vmem>>) attributes {dimension_semantics = [#tpu.dimension_semantics<parallel>], iteration_bounds = array<i64: 1>, scalar_prefetch = 0 : i64, scratch_operands = 0 : i64, tpu.core_type = #tpu.core_type<tc>, window_params = [{transform_indices = @transform_0, window_bounds = array<i64: 2, 3072>}, {pipeline_mode = #tpu.pipeline_mode<synchronous>, transform_indices = @transform_1, window_bounds = array<i64: 1, 3072>}, {transform_indices = @transform_2, window_bounds = array<i64: 2, 3072>}]} {
    %c0 = arith.constant 0 : index
    %c0_0 = arith.constant 0 : index
    %0 = vector.load %arg1[%c0, %c0_0] : memref<2x3072xf32, #tpu.memory_space<vmem>>, vector<2x3072xf32>
    %c0_1 = arith.constant 0 : index
    %c0_2 = arith.constant 0 : index
    %1 = vector.load %arg2[%c0_1, %c0_2] : memref<1x3072xf32, #tpu.memory_space<vmem>>, vector<1x3072xf32>
    %2 = vector.broadcast %1 : vector<1x3072xf32> to vector<2x3072xf32>
    %3 = arith.addf %0, %2 : vector<2x3072xf32>
    %c0_3 = arith.constant 0 : index
    %c0_4 = arith.constant 0 : index
    %4 = vector.load %arg3[%c0_3, %c0_4] : memref<2x3072xf32, #tpu.memory_space<vmem>>, vector<2x3072xf32>
    tpu.vector_store %arg3[%c0_3, %c0_4], %3 {strides = array<i32>} : memref<2x3072xf32, #tpu.memory_space<vmem>>, vector<2x3072xf32>,
    return
  }
  func.func @transform_0(%arg0: i32) -> (i32, i32) {
    %c0_i32 = arith.constant 0 : i32
    %c0_i32_0 = arith.constant 0 : i32
    return %arg0, %c0_i32 : i32, i32
  }
  func.func @transform_1(%arg0: i32) -> (i32, i32) {
    %c0_i32 = arith.constant 0 : i32
    %c0_i32_0 = arith.constant 0 : i32
    %c0_i32_1 = arith.constant 0 : i32
    return %c0_i32, %c0_i32_0 : i32, i32
  }
  func.func @transform_2(%arg0: i32) -> (i32, i32) {
    %c0_i32 = arith.constant 0 : i32
    %c0_i32_0 = arith.constant 0 : i32
    return %arg0, %c0_i32 : i32, i32
  }
}

</mosaic_0001>

<llo_original>
// kernel: tpu_custom_call.1
$region0: #{tpu_custom_call.1}
  #allocation0 [shape = 'u32[]', space=smem, size = 0x4, offset = 0x4, fixed_abs, tag = 'smem constant byte address 0x4 - core index']
  #allocation1 [shape = 'u32[72,128]{1,0:T(1,128)}', space=vmem, size = 0x9000, scoped, tag = 'internal scratch']
  %s0 = inlined_call_operand.hbm [shape: f32[2,3072], index: 0, kind: input, shape index: {}, may-alias: {0,2}]
  %s1 = inlined_call_operand.vmem [shape: f32[1,3072], index: 1, kind: input, shape index: {}]
  %s2 = inlined_call_operand.hbm [shape: f32[2,3072], index: 2, kind: output, shape index: {}, may-alias: {0,2}]
  %s3 = sld [smem:[#allocation0]]
  $region22: #{tpu_custom_call.1} parent=0
    _
  %s5 = ssub.s32 1, %s3
  %s6 = scalar_select 0, %s5, %s3
  $region1: #{tpu_custom_call.1} parent=0
    #allocation2 [shape = 'u8[24576]{0}', space=vmem, size = 0x6000, scoped, tag = 'input window, operand 0, single buffered']
    #allocation3 [shape = 's32[1]{0}', space=sflag, size = 0x4, scoped, tag = 'scoped memory for tpu_custom_call.1']
    #allocation4 [shape = 's32[1]{0}', space=sflag, size = 0x4, scoped, tag = 'scoped memory for tpu_custom_call.1']
    #allocation5 [shape = 'u8[24576]{0}', space=vmem, size = 0x6000, scoped, tag = 'output window, operand 0, single buffered']
    %7 = vsyncpa [#allocation3], 0
    %8 = vsyncpa [#allocation4], 0
    // Predicated region
    $region2: #{tpu_custom_call.1} parent=1 // pred_check
      _
    $region3: #{tpu_custom_call.1} parent=1 // pred_check_branch
      %10 = sbr.rel (0) target = $region5
    $region4: #{tpu_custom_call.1} parent=1 // pred_region
      %12 = vsyncadd [#allocation3], 0
      %s14 = sshll.u32 %s0, 4
      %s15 = int_to_ptr.hbm [resolvable:$true] %s14
      %s16 = sshll.u32 [#allocation2], 4
      %s17 = int_to_ptr.vmem [resolvable:$true] %s16
      %19 = dma.hbm_to_vmem [thread:$0]  %s15, 768, %s17, [#allocation3]
    $region5: #{tpu_custom_call.1} parent=1 // pred_fallthru
      _
    // Predicated region
    $region6: #{tpu_custom_call.1} parent=1 // pred_check
      _
    $region7: #{tpu_custom_call.1} parent=1 // pred_check_branch
      %21 = sbr.rel (0) target = $region9
    $region8: #{tpu_custom_call.1} parent=1 // pred_region
      _
    $region9: #{tpu_custom_call.1} parent=1 // pred_fallthru
      _
    // Predicated region
    $region10: #{tpu_custom_call.1} parent=1 // pred_check
      _
    $region11: #{tpu_custom_call.1} parent=1 // pred_check_branch
      %23 = sbr.rel (0) target = $region13
    $region12: #{tpu_custom_call.1} parent=1 // pred_region
      %25 = dma.done [#allocation3], 768
    $region13: #{tpu_custom_call.1} parent=1 // pred_fallthru
      _
    %v26 = vld [vmem:[#allocation2] sm:$0xff]
    %v27 = vld [vmem:[#allocation2 + $0x8] sm:$0xff]
    %v28 = vld [vmem:[#allocation2 + $0x10] sm:$0xff]
    %v29 = vld [vmem:[#allocation2 + $0x18] sm:$0xff]
    %v30 = vld [vmem:[#allocation2 + $0x20] sm:$0xff]
    %v31 = vld [vmem:[#allocation2 + $0x28] sm:$0xff]
    %v32 = vld [vmem:[%s1] sm:$0xff]
    %v33 = vld [vmem:[%s1 + $0x8] sm:$0xff]
    %v34 = vld [vmem:[%s1 + $0x10] sm:$0xff]
    %v38 = vperm.slane %v32, 0
    %v39 = vperm.slane %v32, 1
    %v40 = vperm.slane %v32, 2
    %v41 = vperm.slane %v32, 3
    %v42 = vperm.slane %v32, 4
    %v43 = vperm.slane %v32, 5
    %v44 = vperm.slane %v32, 6
    %v45 = vperm.slane %v32, 7
    %v46 = vperm.slane %v33, 0
    %v47 = vperm.slane %v33, 1
    %v48 = vperm.slane %v33, 2
    %v49 = vperm.slane %v33, 3
    %v50 = vperm.slane %v33, 4
    %v51 = vperm.slane %v33, 5
    %v52 = vperm.slane %v33, 6
    %v53 = vperm.slane %v33, 7
    %v54 = vperm.slane %v34, 0
    %v55 = vperm.slane %v34, 1
    %v56 = vperm.slane %v34, 2
    %v57 = vperm.slane %v34, 3
    %v58 = vperm.slane %v34, 4
    %v59 = vperm.slane %v34, 5
    %v60 = vperm.slane %v34, 6
    %v61 = vperm.slane %v34, 7
    %v62 = vrot.slane %v39, 6
    %v63 = vrot.slane %v40, 4
    %v64 = vrot.slane %v41, 2
    %v65 = vrot.slane %v43, 6
    %v66 = vrot.slane %v44, 4
    %v67 = vrot.slane %v45, 2
    %v68 = vrot.slane %v47, 6
    %v69 = vrot.slane %v48, 4
    %v70 = vrot.slane %v49, 2
    %v71 = vrot.slane %v51, 6
    %v72 = vrot.slane %v52, 4
    %v73 = vrot.slane %v53, 2
    %v74 = vrot.slane %v55, 6
    %v75 = vrot.slane %v56, 4
    %v76 = vrot.slane %v57, 2
    %v77 = vrot.slane %v59, 6
    %v78 = vrot.slane %v60, 4
    %v79 = vrot.slane %v61, 2
    %vm80 = vcmask 1041408
    %v81 = vsel %vm80, %v38, %v62
    %vm82 = vcmask 1045508
    %v83 = vsel %vm82, %v63, %v64
    %vm84 = vcmask 1043456
    %v85 = vsel %vm84, %v81, %v83
    %v86 = vsel %vm80, %v42, %v65
    %v87 = vsel %vm82, %v66, %v67
    %v88 = vsel %vm84, %v86, %v87
    %v89 = vsel %vm80, %v46, %v68
    %v90 = vsel %vm82, %v69, %v70
    %v91 = vsel %vm84, %v89, %v90
    %v92 = vsel %vm80, %v50, %v71
    %v93 = vsel %vm82, %v72, %v73
    %v94 = vsel %vm84, %v92, %v93
    %v95 = vsel %vm80, %v54, %v74
    %v96 = vsel %vm82, %v75, %v76
    %v97 = vsel %vm84, %v95, %v96
    %v98 = vsel %vm80, %v58, %v77
    %v99 = vsel %vm82, %v78, %v79
    %v100 = vsel %vm84, %v98, %v99
    %v107 = vadd.f32 %v26, %v85
    %v108 = vadd.f32 %v27, %v88
    %v109 = vadd.f32 %v28, %v91
    %v110 = vadd.f32 %v29, %v94
    %v111 = vadd.f32 %v30, %v97
    %v112 = vadd.f32 %v31, %v100
    %113 = vst [vmem:[#allocation5] sm:$0xff] %v107
    %114 = vst [vmem:[#allocation5 + $0x8] sm:$0xff] %v108
    %115 = vst [vmem:[#allocation5 + $0x10] sm:$0xff] %v109
    %116 = vst [vmem:[#allocation5 + $0x18] sm:$0xff] %v110
    %117 = vst [vmem:[#allocation5 + $0x20] sm:$0xff] %v111
    %118 = vst [vmem:[#allocation5 + $0x28] sm:$0xff] %v112
    // Predicated region
    $region14: #{tpu_custom_call.1} parent=1 // pred_check
      _
    $region15: #{tpu_custom_call.1} parent=1 // pred_check_branch
      %120 = sbr.rel (0) target = $region17
    $region16: #{tpu_custom_call.1} parent=1 // pred_region
      %122 = vsyncadd [#allocation4], 0
      %s124 = sshll.u32 [#allocation5], 4
      %s125 = int_to_ptr.vmem [resolvable:$true] %s124
      %s126 = sshll.u32 %s2, 4
      %s127 = int_to_ptr.hbm [resolvable:$true] %s126
      %129 = dma.vmem_to_hbm [thread:$0]  %s125, 768, %s127, [#allocation4]
    $region17: #{tpu_custom_call.1} parent=1 // pred_fallthru
      _
    // Predicated region
    $region18: #{tpu_custom_call.1} parent=1 // pred_check
      _
    $region19: #{tpu_custom_call.1} parent=1 // pred_check_branch
      %131 = sbr.rel (0) target = $region21
    $region20: #{tpu_custom_call.1} parent=1 // pred_region
      %133 = dma.done [#allocation4], 768
    $region21: #{tpu_custom_call.1} parent=1 // pred_fallthru
      _
    %134 = vsyncpa [#allocation3], 1
    %135 = vsyncpa [#allocation4], 1

// kernel: tpu_custom_call.1
$region0: #{tpu_custom_call.1}
  #allocation0 [shape = 'u32[]', space=smem, size = 0x4, offset = 0x4, fixed_abs, tag = 'smem constant byte address 0x4 - core index']
  #allocation1 [shape = 'u32[72,128]{1,0:T(1,128)}', space=vmem, size = 0x9000, scoped, tag = 'internal scratch']
  %s0 = inlined_call_operand.hbm [shape: f32[2,3072], index: 0, kind: input, shape index: {}, may-alias: {0,2}]
  %s1 = inlined_call_operand.vmem [shape: f32[1,3072], index: 1, kind: input, shape index: {}]
  %s2 = inlined_call_operand.hbm [shape: f32[2,3072], index: 2, kind: output, shape index: {}, may-alias: {0,2}]
  %s3 = sld [smem:[#allocation0]]
  $region22: #{tpu_custom_call.1} parent=0
    _
  %s5 = ssub.s32 1, %s3
  %s6 = scalar_select 0, %s5, %s3
  $region1: #{tpu_custom_call.1} parent=0
    #allocation2 [shape = 'u8[24576]{0}', space=vmem, size = 0x6000, scoped, tag = 'input window, operand 0, single buffered']
    #allocation3 [shape = 's32[1]{0}', space=sflag, size = 0x4, scoped, tag = 'scoped memory for tpu_custom_call.1']
    #allocation4 [shape = 's32[1]{0}', space=sflag, size = 0x4, scoped, tag = 'scoped memory for tpu_custom_call.1']
    #allocation5 [shape = 'u8[24576]{0}', space=vmem, size = 0x6000, scoped, tag = 'output window, operand 0, single buffered']
    %7 = vsyncpa [#allocation3], 0
    %8 = vsyncpa [#allocation4], 0
    // Predicated region
    $region2: #{tpu_custom_call.1} parent=1 // pred_check
      _
    $region3: #{tpu_custom_call.1} parent=1 // pred_check_branch
      %10 = sbr.rel (0) target = $region5
    $region4: #{tpu_custom_call.1} parent=1 // pred_region
      %12 = vsyncadd [#allocation3], 0
      %s14 = sshll.u32 %s0, 4
      %s15 = int_to_ptr.hbm [resolvable:$true] %s14
      %s16 = sshll.u32 [#allocation2], 4
      %s17 = int_to_ptr.vmem [resolvable:$true] %s16
      %19 = dma.hbm_to_vmem [thread:$0]  %s15, 768, %s17, [#allocation3]
    $region5: #{tpu_custom_call.1} parent=1 // pred_fallthru
      _
    // Predicated region
    $region6: #{tpu_custom_call.1} parent=1 // pred_check
      _
    $region7: #{tpu_custom_call.1} parent=1 // pred_check_branch
      %21 = sbr.rel (0) target = $region9
    $region8: #{tpu_custom_call.1} parent=1 // pred_region
      _
    $region9: #{tpu_custom_call.1} parent=1 // pred_fallthru
      _
    // Predicated region
    $region10: #{tpu_custom_call.1} parent=1 // pred_check
      _
    $region11: #{tpu_custom_call.1} parent=1 // pred_check_branch
      %23 = sbr.rel (0) target = $region13
    $region12: #{tpu_custom_call.1} parent=1 // pred_region
      %25 = dma.done [#allocation3], 768
    $region13: #{tpu_custom_call.1} parent=1 // pred_fallthru
      _
    %v26 = vld [vmem:[#allocation2] sm:$0xff]
    %v27 = vld [vmem:[#allocation2 + $0x8] sm:$0xff]
    %v28 = vld [vmem:[#allocation2 + $0x10] sm:$0xff]
    %v29 = vld [vmem:[#allocation2 + $0x18] sm:$0xff]
    %v30 = vld [vmem:[#allocation2 + $0x20] sm:$0xff]
    %v31 = vld [vmem:[#allocation2 + $0x28] sm:$0xff]
    %v32 = vld [vmem:[%s1] sm:$0xff]
    %v33 = vld [vmem:[%s1 + $0x8] sm:$0xff]
    %v34 = vld [vmem:[%s1 + $0x10] sm:$0xff]
    %v38 = vperm.slane %v32, 0
    %v39 = vperm.slane %v32, 1
    %v40 = vperm.slane %v32, 2
    %v41 = vperm.slane %v32, 3
    %v42 = vperm.slane %v32, 4
    %v43 = vperm.slane %v32, 5
    %v44 = vperm.slane %v32, 6
    %v45 = vperm.slane %v32, 7
    %v46 = vperm.slane %v33, 0
    %v47 = vperm.slane %v33, 1
    %v48 = vperm.slane %v33, 2
    %v49 = vperm.slane %v33, 3
    %v50 = vperm.slane %v33, 4
    %v51 = vperm.slane %v33, 5
    %v52 = vperm.slane %v33, 6
    %v53 = vperm.slane %v33, 7
    %v54 = vperm.slane %v34, 0
    %v55 = vperm.slane %v34, 1
    %v56 = vperm.slane %v34, 2
    %v57 = vperm.slane %v34, 3
    %v58 = vperm.slane %v34, 4
    %v59 = vperm.slane %v34, 5
    %v60 = vperm.slane %v34, 6
    %v61 = vperm.slane %v34, 7
    %v62 = vrot.slane %v39, 6
    %v63 = vrot.slane %v40, 4
    %v64 = vrot.slane %v41, 2
    %v65 = vrot.slane %v43, 6
    %v66 = vrot.slane %v44, 4
    %v67 = vrot.slane %v45, 2
    %v68 = vrot.slane %v47, 6
    %v69 = vrot.slane %v48, 4
    %v70 = vrot.slane %v49, 2
    %v71 = vrot.slane %v51, 6
    %v72 = vrot.slane %v52, 4
    %v73 = vrot.slane %v53, 2
    %v74 = vrot.slane %v55, 6
    %v75 = vrot.slane %v56, 4
    %v76 = vrot.slane %v57, 2
    %v77 = vrot.slane %v59, 6
    %v78 = vrot.slane %v60, 4
    %v79 = vrot.slane %v61, 2
    %vm80 = vcmask 1041408
    %v81 = vsel %vm80, %v38, %v62
    %vm82 = vcmask 1045508
    %v83 = vsel %vm82, %v63, %v64
    %vm84 = vcmask 1043456
    %v85 = vsel %vm84, %v81, %v83
    %v86 = vsel %vm80, %v42, %v65
    %v87 = vsel %vm82, %v66, %v67
    %v88 = vsel %vm84, %v86, %v87
    %v89 = vsel %vm80, %v46, %v68
    %v90 = vsel %vm82, %v69, %v70
    %v91 = vsel %vm84, %v89, %v90
    %v92 = vsel %vm80, %v50, %v71
    %v93 = vsel %vm82, %v72, %v73
    %v94 = vsel %vm84, %v92, %v93
    %v95 = vsel %vm80, %v54, %v74
    %v96 = vsel %vm82, %v75, %v76
    %v97 = vsel %vm84, %v95, %v96
    %v98 = vsel %vm80, %v58, %v77
    %v99 = vsel %vm82, %v78, %v79
    %v100 = vsel %vm84, %v98, %v99
    %v107 = vadd.f32 %v26, %v85
    %v108 = vadd.f32 %v27, %v88
    %v109 = vadd.f32 %v28, %v91
    %v110 = vadd.f32 %v29, %v94
    %v111 = vadd.f32 %v30, %v97
    %v112 = vadd.f32 %v31, %v100
    %113 = vst [vmem:[#allocation5] sm:$0xff] %v107
    %114 = vst [vmem:[#allocation5 + $0x8] sm:$0xff] %v108
    %115 = vst [vmem:[#allocation5 + $0x10] sm:$0xff] %v109
    %116 = vst [vmem:[#allocation5 + $0x18] sm:$0xff] %v110
    %117 = vst [vmem:[#allocation5 + $0x20] sm:$0xff] %v111
    %118 = vst [vmem:[#allocation5 + $0x28] sm:$0xff] %v112
    // Predicated region
    $region14: #{tpu_custom_call.1} parent=1 // pred_check
      _
    $region15: #{tpu_custom_call.1} parent=1 // pred_check_branch
      %120 = sbr.rel (0) target = $region17
    $region16: #{tpu_custom_call.1} parent=1 // pred_region
      %122 = vsyncadd [#allocation4], 0
      %s124 = sshll.u32 [#allocation5], 4
      %s125 = int_to_ptr.vmem [resolvable:$true] %s124
      %s126 = sshll.u32 %s2, 4
      %s127 = int_to_ptr.hbm [resolvable:$true] %s126
      %129 = dma.vmem_to_hbm [thread:$0]  %s125, 768, %s127, [#allocation4]
    $region17: #{tpu_custom_call.1} parent=1 // pred_fallthru
      _
    // Predicated region
    $region18: #{tpu_custom_call.1} parent=1 // pred_check
      _
    $region19: #{tpu_custom_call.1} parent=1 // pred_check_branch
      %131 = sbr.rel (0) target = $region21
    $region20: #{tpu_custom_call.1} parent=1 // pred_region
      %133 = dma.done [#allocation4], 768
    $region21: #{tpu_custom_call.1} parent=1 // pred_fallthru
      _
    %134 = vsyncpa [#allocation3], 1
    %135 = vsyncpa [#allocation4], 1

</llo_original>
